<compile_context>
chip_gen: v7x
topology: tpu7x:2x2x1
jax: 0.10.0
libtpu: 0.0.40
codegen_flags: <defaults>
</compile_context>

<pallas_src>
import functools
import numpy as np
import jax
import jax.numpy as jnp
from jax.experimental import pallas as pl
from jax.experimental.pallas import tpu as pltpu


# ---------------------------------------------------------------------------
# Configuration (small, deterministic)
# ---------------------------------------------------------------------------
STATE_DIM = 16
HIDDEN_DIM = 32
BATCH = 2
STD_INIT = 0.5
ACTION_RANGE = 1.0
ASSET_CLASSES = {
    "equity": [0, 1, 2],
    "bond": [3, 4],
    "commodity": [5, 6, 7, 8],
}
NUM_CLASSES = len(ASSET_CLASSES)
_CLASS_NAMES = list(ASSET_CLASSES.keys())

# Padded tile sizes (sublane multiple of 8, lane multiple of 128)
B_PAD = 8
STATE_PAD = 128
HID_PAD = 128
OUT_PAD = 128

# Packed-head geometry: head h in {0..3} occupies lanes [h*32, h*32+32) of the
# "lo" packed hidden; the critic (head 4) occupies lanes [0, 32) of the "hi"
# packed hidden.  Output columns: strategic 0:3 | equity 3:6 | bond 6:8 |
# commodity 8:12 | critic 12:13.
HEAD_SLOT = HIDDEN_DIM                                            # 32 lanes per head
HEAD_OUT_DIMS = [NUM_CLASSES] + [len(ASSET_CLASSES[n]) for n in _CLASS_NAMES] + [1]
NUM_HEADS = len(HEAD_OUT_DIMS)                                    # 5
OUT_OFFSETS = [0]
for _d in HEAD_OUT_DIMS:
    OUT_OFFSETS.append(OUT_OFFSETS[-1] + _d)                      # [0,3,6,8,12,13]
CRITIC_COL = OUT_OFFSETS[-2]                                      # 12 (static)

# Weight-slab layout: (6, 128, 128) bf16, one (128,128) block per matmul.
SLAB_W1, SLAB_W2 = 0, 1
SLAB_HW1_LO, SLAB_HW1_HI = 2, 3
SLAB_HW2_LO, SLAB_HW2_HI = 4, 5
NUM_SLABS = 6

# Bias-slab layout: (8, 128) f32, one row per bias vector.
BIAS_B1, BIAS_B2, BIAS_HB1_LO, BIAS_HB1_HI, BIAS_HB2 = 0, 1, 2, 3, 4


def _xavier(key, fan_in, fan_out):
    a = np.sqrt(6.0 / (fan_in + fan_out))
    return jax.random.uniform(key, (fan_in, fan_out), jnp.float32, -a, a)


def _bf16_round_f32(x):
    """Round through bf16 and back to f32 (what the kernel multiplies with)."""
    return np.asarray(jnp.asarray(x, jnp.bfloat16).astype(jnp.float32))


# ---------------------------------------------------------------------------
# Pallas kernel: 6 bf16 MXU matmuls (2 trunk + 4 packed-head)
# ---------------------------------------------------------------------------
def _hac_kernel(action_range, state_ref, wslab_ref, bslab_ref, out_ref):
    f32, bf16 = jnp.float32, jnp.bfloat16

    b = bslab_ref[...]                                   # (8,128) f32
    b1 = b[BIAS_B1:BIAS_B1 + 1, :]
    b2 = b[BIAS_B2:BIAS_B2 + 1, :]
    hb1_lo = b[BIAS_HB1_LO:BIAS_HB1_LO + 1, :]
    hb1_hi = b[BIAS_HB1_HI:BIAS_HB1_HI + 1, :]
    hb2 = b[BIAS_HB2:BIAS_HB2 + 1, :]

    # Shared trunk (native bf16 MXU, f32 accumulate; padded lanes stay exact 0).
    x = state_ref[...].astype(bf16)                                           # (8,128)
    h1 = jnp.maximum(
        jnp.dot(x, wslab_ref[SLAB_W1], preferred_element_type=f32) + b1, 0.0)
    shared = jnp.maximum(
        jnp.dot(h1.astype(bf16), wslab_ref[SLAB_W2],
                preferred_element_type=f32) + b2, 0.0)
    sb = shared.astype(bf16)

    # Packed heads: lo = strategic + 3 tactical classes, hi = critic.
    hh_lo = jnp.maximum(
        jnp.dot(sb, wslab_ref[SLAB_HW1_LO], preferred_element_type=f32) + hb1_lo, 0.0)
    hh_hi = jnp.maximum(
        jnp.dot(sb, wslab_ref[SLAB_HW1_HI], preferred_element_type=f32) + hb1_hi, 0.0)
    y = (jnp.dot(hh_lo.astype(bf16), wslab_ref[SLAB_HW2_LO], preferred_element_type=f32)
         + jnp.dot(hh_hi.astype(bf16), wslab_ref[SLAB_HW2_HI], preferred_element_type=f32)
         + hb2)

    # Actor columns get tanh (* action_range); critic column passes through.
    t = jnp.tanh(y)
    if action_range != 1.0:                       # static Python branch
        t = t * action_range
    col = jax.lax.broadcasted_iota(jnp.int32, y.shape, 1)
    out_ref[...] = jnp.where(col == CRITIC_COL, y, t)


@jax.jit
def _forward_jit(wslab, bslab, strategic_log_std, tactical_log_stds, state):
    B = state.shape[0]
    state_p = jnp.zeros((B_PAD, STATE_PAD), jnp.float32)
    state_p = state_p.at[:B, :STATE_DIM].set(state.astype(jnp.float32))

    vmem = pl.BlockSpec(memory_space=pltpu.MemorySpace.VMEM)
    flops = 2 * B_PAD * HID_PAD * HID_PAD * NUM_SLABS
    bytes_accessed = (wslab.size * wslab.dtype.itemsize
                      + bslab.size * bslab.dtype.itemsize
                      + B_PAD * STATE_PAD * 4 + B_PAD * OUT_PAD * 4)

    out = pl.pallas_call(
        functools.partial(_hac_kernel, float(ACTION_RANGE)),
        out_shape=jax.ShapeDtypeStruct((B_PAD, OUT_PAD), jnp.float32),
        in_specs=[vmem, vmem, vmem],
        out_specs=vmem,
        cost_estimate=pl.CostEstimate(
            flops=flops,
            transcendentals=B_PAD * OUT_PAD,
            bytes_accessed=bytes_accessed,
        ),
    )(state_p, wslab, bslab)

    strategic_mean = out[:B, OUT_OFFSETS[0]:OUT_OFFSETS[1]]
    tactical_means = {}
    for i, name in enumerate(_CLASS_NAMES):
        lo, hi = OUT_OFFSETS[1 + i], OUT_OFFSETS[2 + i]
        tactical_means[name] = out[:B, lo:hi]
    state_value = out[:B, CRITIC_COL:CRITIC_COL + 1]

    strategic_log_std_b = jnp.broadcast_to(strategic_log_std, strategic_mean.shape)
    tactical_log_stds_b = {
        name: jnp.broadcast_to(tactical_log_stds[name], tactical_means[name].shape)
        for name in _CLASS_NAMES
    }
    return (strategic_mean, strategic_log_std_b, tactical_means,
            tactical_log_stds_b, state_value)


def hac_forward_pallas(params, state):
    """Whole forward hot path under one jit + one Pallas call."""
    return _forward_jit(params["wslab"], params["bslab"],
                        params["strategic_log_std"], params["tactical_log_std"],
                        state)


# ---------------------------------------------------------------------------
# Deterministic parameter construction (xavier-uniform weights, zero biases)
# ---------------------------------------------------------------------------
def make_params(key):
    assert STATE_DIM <= STATE_PAD and HIDDEN_DIM <= HID_PAD
    assert (NUM_HEADS - 1) * HEAD_SLOT <= HID_PAD and OUT_OFFSETS[-1] <= OUT_PAD

    keys = jax.random.split(key, 2 + 2 * NUM_HEADS)
    kit = iter(keys)

    wslab = np.zeros((NUM_SLABS, HID_PAD, HID_PAD), np.float32)
    bslab = np.zeros((8, HID_PAD), np.float32)          # biases zero-init (PyTorch)

    w1 = np.asarray(_xavier(next(kit), STATE_DIM, HIDDEN_DIM))
    w2 = np.asarray(_xavier(next(kit), HIDDEN_DIM, HIDDEN_DIM))
    wslab[SLAB_W1, :STATE_DIM, :HIDDEN_DIM] = w1
    wslab[SLAB_W2, :HIDDEN_DIM, :HIDDEN_DIM] = w2

    head_is_tanh = [True] * (1 + NUM_CLASSES) + [False]
    raw_heads = []                                       # bf16-rounded copies for ref
    for h, out_dim in enumerate(HEAD_OUT_DIMS):
        wA = np.asarray(_xavier(next(kit), HIDDEN_DIM, HIDDEN_DIM))
        wB = np.asarray(_xavier(next(kit), HIDDEN_DIM, out_dim))
        lo, hi = OUT_OFFSETS[h], OUT_OFFSETS[h + 1]
        if h < NUM_HEADS - 1:                            # strategic + tactical -> lo
            slot = h * HEAD_SLOT
            wslab[SLAB_HW1_LO, :HIDDEN_DIM, slot:slot + HIDDEN_DIM] = wA
            wslab[SLAB_HW2_LO, slot:slot + HIDDEN_DIM, lo:hi] = wB
        else:                                            # critic -> hi
            wslab[SLAB_HW1_HI, :HIDDEN_DIM, :HIDDEN_DIM] = wA
            wslab[SLAB_HW2_HI, :HIDDEN_DIM, lo:hi] = wB
        raw_heads.append((
            _bf16_round_f32(wA), np.zeros((HIDDEN_DIM,), np.float32),
            _bf16_round_f32(wB), np.zeros((out_dim,), np.float32),
            out_dim, head_is_tanh[h],
        ))

    params = {
        # One contiguous bf16 weight slab in HBM: single DMA, native MXU dtype.
        "wslab": jnp.asarray(wslab, jnp.bfloat16),
        "bslab": jnp.asarray(bslab, jnp.float32),
        "strategic_log_std": jnp.full((NUM_CLASSES,), np.log(STD_INIT), jnp.float32),
        "tactical_log_std": {
            name: jnp.full((len(ASSET_CLASSES[name]),), np.log(STD_INIT), jnp.float32)
            for name in _CLASS_NAMES
        },
        "_raw": {"w1": _bf16_round_f32(w1), "b1": np.zeros((HIDDEN_DIM,), np.float32),
                 "w2": _bf16_round_f32(w2), "b2": np.zeros((HIDDEN_DIM,), np.float32),
                 "heads": raw_heads},
    }
    return params


def reference_forward(params, state):
    """Plain-JAX reference with PyTorch forward semantics, mirroring the kernel's
    bf16-input / f32-accumulate matmul numerics."""
    raw = params["_raw"]

    def mm(a, w):
        return jnp.dot(a.astype(jnp.bfloat16), jnp.asarray(w, jnp.bfloat16),
                       preferred_element_type=jnp.float32)

    h = jnp.maximum(mm(state, raw["w1"]) + raw["b1"], 0.0)
    shared = jnp.maximum(mm(h, raw["w2"]) + raw["b2"], 0.0)
    outs = []
    for (wA, bA, wB, bB, out_dim, is_tanh) in raw["heads"]:
        hh = jnp.maximum(mm(shared, wA) + bA, 0.0)
        y = mm(hh, wB) + bB
        outs.append(jnp.tanh(y) * ACTION_RANGE if is_tanh else y)
    strategic_mean = outs[0]
    tactical_means = {name: outs[1 + i] for i, name in enumerate(_CLASS_NAMES)}
    state_value = outs[-1]
    return strategic_mean, tactical_means, state_value


if __name__ == "__main__":
    key = jax.random.PRNGKey(0)
    pkey, skey = jax.random.split(key)
    params = make_params(pkey)
    state = jax.random.normal(skey, (BATCH, STATE_DIM), jnp.float32)

    outs = hac_forward_pallas(params, state)
    outs = jax.block_until_ready(outs)
    strategic_mean, strategic_log_std, tactical_means, tactical_log_stds, state_value = outs

    # Correctness check against plain-JAX reference (same bf16-rounded numerics).
    ref_sm, ref_tm, ref_v = reference_forward(params, state)
    np.testing.assert_allclose(np.asarray(strategic_mean), np.asarray(ref_sm),
                               rtol=1e-4, atol=1e-4)
    for name in ASSET_CLASSES:
        np.testing.assert_allclose(np.asarray(tactical_means[name]),
                                   np.asarray(ref_tm[name]), rtol=1e-4, atol=1e-4)
    np.testing.assert_allclose(np.asarray(state_value), np.asarray(ref_v),
                               rtol=1e-4, atol=1e-4)

    # Shape sanity (matches the PyTorch module's outputs)
    assert strategic_mean.shape == (BATCH, NUM_CLASSES)
    assert strategic_log_std.shape == (BATCH, NUM_CLASSES)
    for name, idxs in ASSET_CLASSES.items():
        assert tactical_means[name].shape == (BATCH, len(idxs))
        assert tactical_log_stds[name].shape == (BATCH, len(idxs))
    assert state_value.shape == (BATCH, 1)

    print("KERNEL_OK")
</pallas_src>

<mosaic_0001>
module attributes {stable_mosaic.version = 11 : i64} {
  func.func @_hac_kernel(%arg0: memref<8x128xf32, #tpu.memory_space<vmem>>, %arg1: memref<6x128x128xbf16, #tpu.memory_space<vmem>>, %arg2: memref<8x128xf32, #tpu.memory_space<vmem>>, %arg3: memref<8x128xf32, #tpu.memory_space<vmem>>) attributes {dimension_semantics = [], scalar_prefetch = 0 : i64, scratch_operands = 0 : i64, tpu.core_type = #tpu.core_type<tc>} {
    %c0 = arith.constant 0 : index
    %c0_0 = arith.constant 0 : index
    %0 = vector.load %arg2[%c0, %c0_0] : memref<8x128xf32, #tpu.memory_space<vmem>>, vector<8x128xf32>
    %1 = vector.extract_strided_slice %0 {offsets = [0, 0], sizes = [1, 128], strides = [1, 1]} : vector<8x128xf32> to vector<1x128xf32>
    %2 = vector.extract_strided_slice %0 {offsets = [1, 0], sizes = [1, 128], strides = [1, 1]} : vector<8x128xf32> to vector<1x128xf32>
    %3 = vector.extract_strided_slice %0 {offsets = [2, 0], sizes = [1, 128], strides = [1, 1]} : vector<8x128xf32> to vector<1x128xf32>
    %4 = vector.extract_strided_slice %0 {offsets = [3, 0], sizes = [1, 128], strides = [1, 1]} : vector<8x128xf32> to vector<1x128xf32>
    %5 = vector.extract_strided_slice %0 {offsets = [4, 0], sizes = [1, 128], strides = [1, 1]} : vector<8x128xf32> to vector<1x128xf32>
    %c0_1 = arith.constant 0 : index
    %c0_2 = arith.constant 0 : index
    %6 = vector.load %arg0[%c0_1, %c0_2] : memref<8x128xf32, #tpu.memory_space<vmem>>, vector<8x128xf32>
    %7 = arith.truncf %6 : vector<8x128xf32> to vector<8x128xbf16>
    %c0_3 = arith.constant 0 : index
    %c0_4 = arith.constant 0 : index
    %c0_5 = arith.constant 0 : index
    %8 = vector.load %arg1[%c0_3, %c0_4, %c0_5] : memref<6x128x128xbf16, #tpu.memory_space<vmem>>, vector<1x128x128xbf16>
    %9 = vector.shape_cast %8 : vector<1x128x128xbf16> to vector<128x128xbf16>
    %cst = arith.constant dense<0.000000e+00> : vector<8x128xf32>
    %10 = tpu.matmul %7, %9, %cst {dimension_numbers = #tpu.dot_dimension_numbers<[1], [0], [0], [1], [0, 0, 1, 1], [], []>} : vector<8x128xbf16>, vector<128x128xbf16>, vector<8x128xf32> -> vector<8x128xf32>
    %11 = vector.broadcast %1 : vector<1x128xf32> to vector<8x128xf32>
    %12 = arith.addf %10, %11 : vector<8x128xf32>
    %cst_6 = arith.constant 0.000000e+00 : f32
    %13 = vector.broadcast %cst_6 : f32 to vector<8x128xf32>
    %14 = arith.maximumf %12, %13 : vector<8x128xf32>
    %15 = arith.truncf %14 : vector<8x128xf32> to vector<8x128xbf16>
    %c1 = arith.constant 1 : index
    %c0_7 = arith.constant 0 : index
    %c0_8 = arith.constant 0 : index
    %16 = vector.load %arg1[%c1, %c0_7, %c0_8] : memref<6x128x128xbf16, #tpu.memory_space<vmem>>, vector<1x128x128xbf16>
    %17 = vector.shape_cast %16 : vector<1x128x128xbf16> to vector<128x128xbf16>
    %cst_9 = arith.constant dense<0.000000e+00> : vector<8x128xf32>
    %18 = tpu.matmul %15, %17, %cst_9 {dimension_numbers = #tpu.dot_dimension_numbers<[1], [0], [0], [1], [0, 0, 1, 1], [], []>} : vector<8x128xbf16>, vector<128x128xbf16>, vector<8x128xf32> -> vector<8x128xf32>
    %19 = vector.broadcast %2 : vector<1x128xf32> to vector<8x128xf32>
    %20 = arith.addf %18, %19 : vector<8x128xf32>
    %cst_10 = arith.constant 0.000000e+00 : f32
    %21 = vector.broadcast %cst_10 : f32 to vector<8x128xf32>
    %22 = arith.maximumf %20, %21 : vector<8x128xf32>
    %23 = arith.truncf %22 : vector<8x128xf32> to vector<8x128xbf16>
    %c2 = arith.constant 2 : index
    %c0_11 = arith.constant 0 : index
    %c0_12 = arith.constant 0 : index
    %24 = vector.load %arg1[%c2, %c0_11, %c0_12] : memref<6x128x128xbf16, #tpu.memory_space<vmem>>, vector<1x128x128xbf16>
    %25 = vector.shape_cast %24 : vector<1x128x128xbf16> to vector<128x128xbf16>
    %cst_13 = arith.constant dense<0.000000e+00> : vector<8x128xf32>
    %26 = tpu.matmul %23, %25, %cst_13 {dimension_numbers = #tpu.dot_dimension_numbers<[1], [0], [0], [1], [0, 0, 1, 1], [], []>} : vector<8x128xbf16>, vector<128x128xbf16>, vector<8x128xf32> -> vector<8x128xf32>
    %27 = vector.broadcast %3 : vector<1x128xf32> to vector<8x128xf32>
    %28 = arith.addf %26, %27 : vector<8x128xf32>
    %cst_14 = arith.constant 0.000000e+00 : f32
    %29 = vector.broadcast %cst_14 : f32 to vector<8x128xf32>
    %30 = arith.maximumf %28, %29 : vector<8x128xf32>
    %c3 = arith.constant 3 : index
    %c0_15 = arith.constant 0 : index
    %c0_16 = arith.constant 0 : index
    %31 = vector.load %arg1[%c3, %c0_15, %c0_16] : memref<6x128x128xbf16, #tpu.memory_space<vmem>>, vector<1x128x128xbf16>
    %32 = vector.shape_cast %31 : vector<1x128x128xbf16> to vector<128x128xbf16>
    %cst_17 = arith.constant dense<0.000000e+00> : vector<8x128xf32>
    %33 = tpu.matmul %23, %32, %cst_17 {dimension_numbers = #tpu.dot_dimension_numbers<[1], [0], [0], [1], [0, 0, 1, 1], [], []>} : vector<8x128xbf16>, vector<128x128xbf16>, vector<8x128xf32> -> vector<8x128xf32>
    %34 = vector.broadcast %4 : vector<1x128xf32> to vector<8x128xf32>
    %35 = arith.addf %33, %34 : vector<8x128xf32>
    %cst_18 = arith.constant 0.000000e+00 : f32
    %36 = vector.broadcast %cst_18 : f32 to vector<8x128xf32>
    %37 = arith.maximumf %35, %36 : vector<8x128xf32>
    %38 = arith.truncf %30 : vector<8x128xf32> to vector<8x128xbf16>
    %c4 = arith.constant 4 : index
    %c0_19 = arith.constant 0 : index
    %c0_20 = arith.constant 0 : index
    %39 = vector.load %arg1[%c4, %c0_19, %c0_20] : memref<6x128x128xbf16, #tpu.memory_space<vmem>>, vector<1x128x128xbf16>
    %40 = vector.shape_cast %39 : vector<1x128x128xbf16> to vector<128x128xbf16>
    %cst_21 = arith.constant dense<0.000000e+00> : vector<8x128xf32>
    %41 = tpu.matmul %38, %40, %cst_21 {dimension_numbers = #tpu.dot_dimension_numbers<[1], [0], [0], [1], [0, 0, 1, 1], [], []>} : vector<8x128xbf16>, vector<128x128xbf16>, vector<8x128xf32> -> vector<8x128xf32>
    %42 = arith.truncf %37 : vector<8x128xf32> to vector<8x128xbf16>
    %c5 = arith.constant 5 : index
    %c0_22 = arith.constant 0 : index
    %c0_23 = arith.constant 0 : index
    %43 = vector.load %arg1[%c5, %c0_22, %c0_23] : memref<6x128x128xbf16, #tpu.memory_space<vmem>>, vector<1x128x128xbf16>
    %44 = vector.shape_cast %43 : vector<1x128x128xbf16> to vector<128x128xbf16>
    %cst_24 = arith.constant dense<0.000000e+00> : vector<8x128xf32>
    %45 = tpu.matmul %42, %44, %cst_24 {dimension_numbers = #tpu.dot_dimension_numbers<[1], [0], [0], [1], [0, 0, 1, 1], [], []>} : vector<8x128xbf16>, vector<128x128xbf16>, vector<8x128xf32> -> vector<8x128xf32>
    %46 = arith.addf %41, %45 : vector<8x128xf32>
    %47 = vector.broadcast %5 : vector<1x128xf32> to vector<8x128xf32>
    %48 = arith.addf %46, %47 : vector<8x128xf32>
    %49 = math.tanh %48 : vector<8x128xf32>
    %50 = tpu.iota {dimensions = array<i32: 1>} : vector<8x128xi32>
    %c12_i32 = arith.constant 12 : i32
    %51 = vector.broadcast %c12_i32 : i32 to vector<8x128xi32>
    %52 = arith.cmpi eq, %50, %51 : vector<8x128xi32>
    %53 = arith.select %52, %48, %49 : vector<8x128xi1>, vector<8x128xf32>
    %c0_25 = arith.constant 0 : index
    %c0_26 = arith.constant 0 : index
    %54 = vector.load %arg3[%c0_25, %c0_26] : memref<8x128xf32, #tpu.memory_space<vmem>>, vector<8x128xf32>
    tpu.vector_store %arg3[%c0_25, %c0_26], %53 {strides = array<i32>} : memref<8x128xf32, #tpu.memory_space<vmem>>, vector<8x128xf32>,
    return
  }
}

</mosaic_0001>

<llo_original>
// kernel: _forward_jit.1
$region0: #{_forward_jit.1}
  #allocation0 [shape = 'u32[]', space=smem, size = 0x4, offset = 0x4, fixed_abs, tag = 'smem constant byte address 0x4 - core index']
  #allocation1 [shape = 'u32[144,128]{1,0:T(1,128)}', space=vmem, size = 0x12000, scoped, tag = 'internal scratch']
  %s0 = inlined_call_operand.vmem [shape: f32[8,128], index: 0, kind: input, shape index: {}]
  %s1 = inlined_call_operand.hbm [shape: bf16[6,128,128], index: 1, kind: input, shape index: {}]
  %s2 = inlined_call_operand.vmem [shape: f32[8,128], index: 2, kind: input, shape index: {}]
  %s3 = inlined_call_operand.vmem [shape: f32[8,128], index: 3, kind: output, shape index: {}]
  %s4 = sld [smem:[#allocation0]]
  $region26: #{_forward_jit.1} parent=0
    _
  %s6 = ssub.s32 1, %s4
  %s7 = scalar_select 0, %s6, %s4
  $region1: #{_forward_jit.1} parent=0
    #allocation2 [shape = 'u8[196608]{0}', space=vmem, size = 0x30000, scoped, tag = 'input window, operand 1, single buffered']
    #allocation3 [shape = 's32[1]{0}', space=sflag, size = 0x4, scoped, tag = 'scoped memory for _forward_jit.1']
    %8 = vsyncpa [#allocation3], 0
    // Predicated region
    $region2: #{_forward_jit.1} parent=1 // pred_check
      _
    $region3: #{_forward_jit.1} parent=1 // pred_check_branch
      %10 = sbr.rel (0) target = $region5
    $region4: #{_forward_jit.1} parent=1 // pred_region
      _
    $region5: #{_forward_jit.1} parent=1 // pred_fallthru
      _
    // Predicated region
    $region6: #{_forward_jit.1} parent=1 // pred_check
      _
    $region7: #{_forward_jit.1} parent=1 // pred_check_branch
      %12 = sbr.rel (0) target = $region9
    $region8: #{_forward_jit.1} parent=1 // pred_region
      %s14 = ssub.s32 6144, 6144
      %15 = vsyncadd [#allocation3], %s14
      %s16 = sshll.u32 [#allocation2], 4
      %s17 = int_to_ptr.vmem [resolvable:$true] %s16
      %22 = dma.hbm_to_vmem [thread:$0]  %s1, 6144, %s17, [#allocation3], 64, 64, 4
    $region9: #{_forward_jit.1} parent=1 // pred_fallthru
      _
    // Predicated region
    $region10: #{_forward_jit.1} parent=1 // pred_check
      _
    $region11: #{_forward_jit.1} parent=1 // pred_check_branch
      %24 = sbr.rel (0) target = $region13
    $region12: #{_forward_jit.1} parent=1 // pred_region
      _
    $region13: #{_forward_jit.1} parent=1 // pred_fallthru
      _
    // Predicated region
    $region14: #{_forward_jit.1} parent=1 // pred_check
      _
    $region15: #{_forward_jit.1} parent=1 // pred_check_branch
      %26 = sbr.rel (0) target = $region17
    $region16: #{_forward_jit.1} parent=1 // pred_region
      %27 = dma.done [#allocation3], 6144
    $region17: #{_forward_jit.1} parent=1 // pred_fallthru
      _
    %v29 = vld [vmem:[%s2] sm:$0xff]
    %v30 = vld [vmem:[%s0] sm:$0xff]
    %v31 = vpack.c.bf16 %v30, %v30
    %v32 = vld [vmem:[#allocation2] sm:$0xf]
    %v33 = vld [vmem:[#allocation2 + $0x4] sm:$0xf]
    %v34 = vld [vmem:[#allocation2 + $0x8] sm:$0xf]
    %v35 = vld [vmem:[#allocation2 + $0xc] sm:$0xf]
    %v36 = vld [vmem:[#allocation2 + $0x10] sm:$0xf]
    %v37 = vld [vmem:[#allocation2 + $0x14] sm:$0xf]
    %v38 = vld [vmem:[#allocation2 + $0x18] sm:$0xf]
    %v39 = vld [vmem:[#allocation2 + $0x1c] sm:$0xf]
    %v40 = vld [vmem:[#allocation2 + $0x20] sm:$0xf]
    %v41 = vld [vmem:[#allocation2 + $0x24] sm:$0xf]
    %v42 = vld [vmem:[#allocation2 + $0x28] sm:$0xf]
    %v43 = vld [vmem:[#allocation2 + $0x2c] sm:$0xf]
    %v44 = vld [vmem:[#allocation2 + $0x30] sm:$0xf]
    %v45 = vld [vmem:[#allocation2 + $0x34] sm:$0xf]
    %v46 = vld [vmem:[#allocation2 + $0x38] sm:$0xf]
    %v47 = vld [vmem:[#allocation2 + $0x3c] sm:$0xf]
    %v48 = vlaneseq
    %v49 = vshrl.u32 %v48, 7
    %v50 = vsub.s32 0, %v49
    %v51 = vrot.slane %v29, %v50
    %v68 = vunpack.c.l.b16 %v32
    %v69 = vunpack.c.l.b16 %v33
    %v70 = vunpack.c.l.b16 %v34
    %v71 = vunpack.c.l.b16 %v35
    %v72 = vunpack.c.l.b16 %v36
    %v73 = vunpack.c.l.b16 %v37
    %v74 = vunpack.c.l.b16 %v38
    %v75 = vunpack.c.l.b16 %v39
    %v76 = vunpack.c.l.b16 %v40
    %v77 = vunpack.c.l.b16 %v41
    %v78 = vunpack.c.l.b16 %v42
    %v79 = vunpack.c.l.b16 %v43
    %v80 = vunpack.c.l.b16 %v44
    %v81 = vunpack.c.l.b16 %v45
    %v82 = vunpack.c.l.b16 %v46
    %v83 = vunpack.c.l.b16 %v47
    %v84 = vpack.c.b16 %v69, %v68
    %v85 = vpack.c.b16 %v71, %v70
    %v86 = vpack.c.b16 %v73, %v72
    %v87 = vpack.c.b16 %v75, %v74
    %v88 = vpack.c.b16 %v77, %v76
    %v89 = vpack.c.b16 %v79, %v78
    %v90 = vpack.c.b16 %v81, %v80
    %v91 = vpack.c.b16 %v83, %v82
    %100 = vmatprep.subr.bf16.mxu0 0
    %101 = vmatpush1.bf16.msra.mxu0 %v84
    %102 = vmatprep.subr.bf16.mxu0 0
    %103 = vmatpush1.bf16.msra.mxu0 %v85
    %104 = vmatprep.subr.bf16.mxu0 0
    %105 = vmatpush1.bf16.msra.mxu0 %v86
    %106 = vmatprep.subr.bf16.mxu0 0
    %107 = vmatpush1.bf16.msra.mxu0 %v87
    %108 = vmatprep.subr.bf16.mxu0 0
    %109 = vmatpush1.bf16.msra.mxu0 %v88
    %110 = vmatprep.subr.bf16.mxu0 0
    %111 = vmatpush1.bf16.msra.mxu0 %v89
    %112 = vmatprep.subr.bf16.mxu0 0
    %113 = vmatpush1.bf16.msra.mxu0 %v90
    %114 = vmatprep.subr.bf16.mxu0 0
    %115 = vmatpush1.bf16.msra.mxu0 %v91
    %116 = vmatprep.subr.bf16.mxu0 0
    %117 = vmatpush1.bf16.msra.mxu0 0
    %118 = vmatprep.subr.bf16.mxu0 0
    %119 = vmatpush1.bf16.msra.mxu0 0
    %120 = vmatprep.subr.bf16.mxu0 0
    %121 = vmatpush1.bf16.msra.mxu0 0
    %122 = vmatprep.subr.bf16.mxu0 0
    %123 = vmatpush1.bf16.msra.mxu0 0
    %124 = vmatprep.subr.bf16.mxu0 0
    %125 = vmatpush1.bf16.msra.mxu0 0
    %126 = vmatprep.subr.bf16.mxu0 0
    %127 = vmatpush1.bf16.msra.mxu0 0
    %128 = vmatprep.subr.bf16.mxu0 0
    %129 = vmatpush1.bf16.msra.mxu0 0
    %130 = vmatprep.subr.bf16.mxu0 0
    %131 = vmatpush1.bf16.msra.mxu0 0
    %132 = vmatprep.mubr.bf16.mxu0 0
    %133 = vmatmul.mubr.bf16.gmra.mrb[0].mxu0 %v31
    %v134 = vpop.f32.mrb[0].mxu0
    %v135 = vadd.f32 %v51, %v134
    %v136 = vpop.f32.mrb[0].mxu0
    %v137 = vpop.f32.mrb[0].mxu0
    %v138 = vpop.f32.mrb[0].mxu0
    %139 = vdwg.mxu0
    %v140 = vmax.f32 %v135, 0.0
    %v141 = vpack.c.bf16 %v140, %v140
    %s142 = scalar_lea.vmem [#allocation2], 64
    %v143 = vld [vmem:[%s142] sm:$0xf]
    %v144 = vld [vmem:[%s142 + $0x4] sm:$0xf]
    %v145 = vld [vmem:[%s142 + $0x8] sm:$0xf]
    %v146 = vld [vmem:[%s142 + $0xc] sm:$0xf]
    %v147 = vld [vmem:[%s142 + $0x10] sm:$0xf]
    %v148 = vld [vmem:[%s142 + $0x14] sm:$0xf]
    %v149 = vld [vmem:[%s142 + $0x18] sm:$0xf]
    %v150 = vld [vmem:[%s142 + $0x1c] sm:$0xf]
    %v151 = vld [vmem:[%s142 + $0x20] sm:$0xf]
    %v152 = vld [vmem:[%s142 + $0x24] sm:$0xf]
    %v153 = vld [vmem:[%s142 + $0x28] sm:$0xf]
    %v154 = vld [vmem:[%s142 + $0x2c] sm:$0xf]
    %v155 = vld [vmem:[%s142 + $0x30] sm:$0xf]
    %v156 = vld [vmem:[%s142 + $0x34] sm:$0xf]
    %v157 = vld [vmem:[%s142 + $0x38] sm:$0xf]
    %v158 = vld [vmem:[%s142 + $0x3c] sm:$0xf]
    %v159 = vlaneseq
    %v160 = vshrl.u32 %v159, 7
    %v161 = vsub.s32 1, %v160
    %v162 = vrot.slane %v29, %v161
    %v179 = vunpack.c.l.b16 %v143
    %v180 = vunpack.c.l.b16 %v144
    %v181 = vunpack.c.l.b16 %v145
    %v182 = vunpack.c.l.b16 %v146
    %v183 = vunpack.c.l.b16 %v147
    %v184 = vunpack.c.l.b16 %v148
    %v185 = vunpack.c.l.b16 %v149
    %v186 = vunpack.c.l.b16 %v150
    %v187 = vunpack.c.l.b16 %v151
    %v188 = vunpack.c.l.b16 %v152
    %v189 = vunpack.c.l.b16 %v153
    %v190 = vunpack.c.l.b16 %v154
    %v191 = vunpack.c.l.b16 %v155
    %v192 = vunpack.c.l.b16 %v156
    %v193 = vunpack.c.l.b16 %v157
    %v194 = vunpack.c.l.b16 %v158
    %v195 = vpack.c.b16 %v180, %v179
    %v196 = vpack.c.b16 %v182, %v181
    %v197 = vpack.c.b16 %v184, %v183
    %v198 = vpack.c.b16 %v186, %v185
    %v199 = vpack.c.b16 %v188, %v187
    %v200 = vpack.c.b16 %v190, %v189
    %v201 = vpack.c.b16 %v192, %v191
    %v202 = vpack.c.b16 %v194, %v193
    %211 = vmatprep.subr.bf16.mxu0 0
    %212 = vmatpush1.bf16.msra.mxu0 %v195
    %213 = vmatprep.subr.bf16.mxu0 0
    %214 = vmatpush1.bf16.msra.mxu0 %v196
    %215 = vmatprep.subr.bf16.mxu0 0
    %216 = vmatpush1.bf16.msra.mxu0 %v197
    %217 = vmatprep.subr.bf16.mxu0 0
    %218 = vmatpush1.bf16.msra.mxu0 %v198
    %219 = vmatprep.subr.bf16.mxu0 0
    %220 = vmatpush1.bf16.msra.mxu0 %v199
    %221 = vmatprep.subr.bf16.mxu0 0
    %222 = vmatpush1.bf16.msra.mxu0 %v200
    %223 = vmatprep.subr.bf16.mxu0 0
    %224 = vmatpush1.bf16.msra.mxu0 %v201
    %225 = vmatprep.subr.bf16.mxu0 0
    %226 = vmatpush1.bf16.msra.mxu0 %v202
    %227 = vmatprep.subr.bf16.mxu0 0
    %228 = vmatpush1.bf16.msra.mxu0 0
    %229 = vmatprep.subr.bf16.mxu0 0
    %230 = vmatpush1.bf16.msra.mxu0 0
    %231 = vmatprep.subr.bf16.mxu0 0
    %232 = vmatpush1.bf16.msra.mxu0 0
    %233 = vmatprep.subr.bf16.mxu0 0
    %234 = vmatpush1.bf16.msra.mxu0 0
    %235 = vmatprep.subr.bf16.mxu0 0
    %236 = vmatpush1.bf16.msra.mxu0 0
    %237 = vmatprep.subr.bf16.mxu0 0
    %238 = vmatpush1.bf16.msra.mxu0 0
    %239 = vmatprep.subr.bf16.mxu0 0
    %240 = vmatpush1.bf16.msra.mxu0 0
    %241 = vmatprep.subr.bf16.mxu0 0
    %242 = vmatpush1.bf16.msra.mxu0 0
    %243 = vmatprep.mubr.bf16.mxu0 0
    %244 = vmatmul.mubr.bf16.gmra.mrb[0].mxu0 %v141
    %v245 = vpop.f32.mrb[0].mxu0
    %v246 = vadd.f32 %v162, %v245
    %v247 = vpop.f32.mrb[0].mxu0
    %v248 = vpop.f32.mrb[0].mxu0
    %v249 = vpop.f32.mrb[0].mxu0
    %250 = vdwg.mxu0
    %v251 = vmax.f32 %v246, 0.0
    %v252 = vpack.c.bf16 %v251, %v251
    %s253 = scalar_lea.vmem [#allocation2], 128
    %v254 = vld [vmem:[%s253] sm:$0xf]
    %v255 = vld [vmem:[%s253 + $0x4] sm:$0xf]
    %v256 = vld [vmem:[%s253 + $0x8] sm:$0xf]
    %v257 = vld [vmem:[%s253 + $0xc] sm:$0xf]
    %v258 = vld [vmem:[%s253 + $0x10] sm:$0xf]
    %v259 = vld [vmem:[%s253 + $0x14] sm:$0xf]
    %v260 = vld [vmem:[%s253 + $0x18] sm:$0xf]
    %v261 = vld [vmem:[%s253 + $0x1c] sm:$0xf]
    %v262 = vld [vmem:[%s253 + $0x20] sm:$0xf]
    %v263 = vld [vmem:[%s253 + $0x24] sm:$0xf]
    %v264 = vld [vmem:[%s253 + $0x28] sm:$0xf]
    %v265 = vld [vmem:[%s253 + $0x2c] sm:$0xf]
    %v266 = vld [vmem:[%s253 + $0x30] sm:$0xf]
    %v267 = vld [vmem:[%s253 + $0x34] sm:$0xf]
    %v268 = vld [vmem:[%s253 + $0x38] sm:$0xf]
    %v269 = vld [vmem:[%s253 + $0x3c] sm:$0xf]
    %v270 = vlaneseq
    %v271 = vshrl.u32 %v270, 7
    %v272 = vsub.s32 2, %v271
    %v273 = vrot.slane %v29, %v272
    %v290 = vunpack.c.l.b16 %v254
    %v291 = vunpack.c.l.b16 %v255
    %v292 = vunpack.c.l.b16 %v256
    %v293 = vunpack.c.l.b16 %v257
    %v294 = vunpack.c.l.b16 %v258
    %v295 = vunpack.c.l.b16 %v259
    %v296 = vunpack.c.l.b16 %v260
    %v297 = vunpack.c.l.b16 %v261
    %v298 = vunpack.c.l.b16 %v262
    %v299 = vunpack.c.l.b16 %v263
    %v300 = vunpack.c.l.b16 %v264
    %v301 = vunpack.c.l.b16 %v265
    %v302 = vunpack.c.l.b16 %v266
    %v303 = vunpack.c.l.b16 %v267
    %v304 = vunpack.c.l.b16 %v268
    %v305 = vunpack.c.l.b16 %v269
    %v306 = vpack.c.b16 %v291, %v290
    %v307 = vpack.c.b16 %v293, %v292
    %v308 = vpack.c.b16 %v295, %v294
    %v309 = vpack.c.b16 %v297, %v296
    %v310 = vpack.c.b16 %v299, %v298
    %v311 = vpack.c.b16 %v301, %v300
    %v312 = vpack.c.b16 %v303, %v302
    %v313 = vpack.c.b16 %v305, %v304
    %322 = vmatprep.subr.bf16.mxu0 0
    %323 = vmatpush1.bf16.msra.mxu0 %v306
    %324 = vmatprep.subr.bf16.mxu0 0
    %325 = vmatpush1.bf16.msra.mxu0 %v307
    %326 = vmatprep.subr.bf16.mxu0 0
    %327 = vmatpush1.bf16.msra.mxu0 %v308
    %328 = vmatprep.subr.bf16.mxu0 0
    %329 = vmatpush1.bf16.msra.mxu0 %v309
    %330 = vmatprep.subr.bf16.mxu0 0
    %331 = vmatpush1.bf16.msra.mxu0 %v310
    %332 = vmatprep.subr.bf16.mxu0 0
    %333 = vmatpush1.bf16.msra.mxu0 %v311
    %334 = vmatprep.subr.bf16.mxu0 0
    %335 = vmatpush1.bf16.msra.mxu0 %v312
    %336 = vmatprep.subr.bf16.mxu0 0
    %337 = vmatpush1.bf16.msra.mxu0 %v313
    %338 = vmatprep.subr.bf16.mxu0 0
    %339 = vmatpush1.bf16.msra.mxu0 0
    %340 = vmatprep.subr.bf16.mxu0 0
    %341 = vmatpush1.bf16.msra.mxu0 0
    %342 = vmatprep.subr.bf16.mxu0 0
    %343 = vmatpush1.bf16.msra.mxu0 0
    %344 = vmatprep.subr.bf16.mxu0 0
    %345 = vmatpush1.bf16.msra.mxu0 0
    %346 = vmatprep.subr.bf16.mxu0 0
    %347 = vmatpush1.bf16.msra.mxu0 0
    %348 = vmatprep.subr.bf16.mxu0 0
    %349 = vmatpush1.bf16.msra.mxu0 0
    %350 = vmatprep.subr.bf16.mxu0 0
    %351 = vmatpush1.bf16.msra.mxu0 0
    %352 = vmatprep.subr.bf16.mxu0 0
    %353 = vmatpush1.bf16.msra.mxu0 0
    %354 = vmatprep.mubr.bf16.mxu0 0
    %355 = vmatmul.mubr.bf16.gmra.mrb[0].mxu0 %v252
    %v356 = vpop.f32.mrb[0].mxu0
    %v357 = vadd.f32 %v273, %v356
    %v358 = vpop.f32.mrb[0].mxu0
    %v359 = vpop.f32.mrb[0].mxu0
    %v360 = vpop.f32.mrb[0].mxu0
    %361 = vdwg.mxu0
    %v362 = vmax.f32 %v357, 0.0
    %s363 = scalar_lea.vmem [#allocation2], 192
    %v364 = vld [vmem:[%s363] sm:$0xf]
    %v365 = vld [vmem:[%s363 + $0x4] sm:$0xf]
    %v366 = vld [vmem:[%s363 + $0x8] sm:$0xf]
    %v367 = vld [vmem:[%s363 + $0xc] sm:$0xf]
    %v368 = vld [vmem:[%s363 + $0x10] sm:$0xf]
    %v369 = vld [vmem:[%s363 + $0x14] sm:$0xf]
    %v370 = vld [vmem:[%s363 + $0x18] sm:$0xf]
    %v371 = vld [vmem:[%s363 + $0x1c] sm:$0xf]
    %v372 = vld [vmem:[%s363 + $0x20] sm:$0xf]
    %v373 = vld [vmem:[%s363 + $0x24] sm:$0xf]
    %v374 = vld [vmem:[%s363 + $0x28] sm:$0xf]
    %v375 = vld [vmem:[%s363 + $0x2c] sm:$0xf]
    %v376 = vld [vmem:[%s363 + $0x30] sm:$0xf]
    %v377 = vld [vmem:[%s363 + $0x34] sm:$0xf]
    %v378 = vld [vmem:[%s363 + $0x38] sm:$0xf]
    %v379 = vld [vmem:[%s363 + $0x3c] sm:$0xf]
    %v380 = vlaneseq
    %v381 = vshrl.u32 %v380, 7
    %v382 = vsub.s32 3, %v381
    %v383 = vrot.slane %v29, %v382
    %v400 = vunpack.c.l.b16 %v364
    %v401 = vunpack.c.l.b16 %v365
    %v402 = vunpack.c.l.b16 %v366
    %v403 = vunpack.c.l.b16 %v367
    %v404 = vunpack.c.l.b16 %v368
    %v405 = vunpack.c.l.b16 %v369
    %v406 = vunpack.c.l.b16 %v370
    %v407 = vunpack.c.l.b16 %v371
    %v408 = vunpack.c.l.b16 %v372
    %v409 = vunpack.c.l.b16 %v373
    %v410 = vunpack.c.l.b16 %v374
    %v411 = vunpack.c.l.b16 %v375
    %v412 = vunpack.c.l.b16 %v376
    %v413 = vunpack.c.l.b16 %v377
    %v414 = vunpack.c.l.b16 %v378
    %v415 = vunpack.c.l.b16 %v379
    %v416 = vpack.c.b16 %v401, %v400
    %v417 = vpack.c.b16 %v403, %v402
    %v418 = vpack.c.b16 %v405, %v404
    %v419 = vpack.c.b16 %v407, %v406
    %v420 = vpack.c.b16 %v409, %v408
    %v421 = vpack.c.b16 %v411, %v410
    %v422 = vpack.c.b16 %v413, %v412
    %v423 = vpack.c.b16 %v415, %v414
    %432 = vmatprep.subr.bf16.mxu0 0
    %433 = vmatpush1.bf16.msra.mxu0 %v416
    %434 = vmatprep.subr.bf16.mxu0 0
    %435 = vmatpush1.bf16.msra.mxu0 %v417
    %436 = vmatprep.subr.bf16.mxu0 0
    %437 = vmatpush1.bf16.msra.mxu0 %v418
    %438 = vmatprep.subr.bf16.mxu0 0
    %439 = vmatpush1.bf16.msra.mxu0 %v419
    %440 = vmatprep.subr.bf16.mxu0 0
    %441 = vmatpush1.bf16.msra.mxu0 %v420
    %442 = vmatprep.subr.bf16.mxu0 0
    %443 = vmatpush1.bf16.msra.mxu0 %v421
    %444 = vmatprep.subr.bf16.mxu0 0
    %445 = vmatpush1.bf16.msra.mxu0 %v422
    %446 = vmatprep.subr.bf16.mxu0 0
    %447 = vmatpush1.bf16.msra.mxu0 %v423
    %448 = vmatprep.subr.bf16.mxu0 0
    %449 = vmatpush1.bf16.msra.mxu0 0
    %450 = vmatprep.subr.bf16.mxu0 0
    %451 = vmatpush1.bf16.msra.mxu0 0
    %452 = vmatprep.subr.bf16.mxu0 0
    %453 = vmatpush1.bf16.msra.mxu0 0
    %454 = vmatprep.subr.bf16.mxu0 0
    %455 = vmatpush1.bf16.msra.mxu0 0
    %456 = vmatprep.subr.bf16.mxu0 0
    %457 = vmatpush1.bf16.msra.mxu0 0
    %458 = vmatprep.subr.bf16.mxu0 0
    %459 = vmatpush1.bf16.msra.mxu0 0
    %460 = vmatprep.subr.bf16.mxu0 0
    %461 = vmatpush1.bf16.msra.mxu0 0
    %462 = vmatprep.subr.bf16.mxu0 0
    %463 = vmatpush1.bf16.msra.mxu0 0
    %464 = vmatprep.mubr.bf16.mxu0 0
    %465 = vmatmul.mubr.bf16.gmra.mrb[0].mxu0 %v252
    %v466 = vpop.f32.mrb[0].mxu0
    %v467 = vadd.f32 %v383, %v466
    %v468 = vpop.f32.mrb[0].mxu0
    %v469 = vpop.f32.mrb[0].mxu0
    %v470 = vpop.f32.mrb[0].mxu0
    %471 = vdwg.mxu0
    %v472 = vmax.f32 %v467, 0.0
    %v473 = vpack.c.bf16 %v362, %v362
    %s474 = scalar_lea.vmem [#allocation2], 256
    %v475 = vld [vmem:[%s474] sm:$0xf]
    %v476 = vld [vmem:[%s474 + $0x4] sm:$0xf]
    %v477 = vld [vmem:[%s474 + $0x8] sm:$0xf]
    %v478 = vld [vmem:[%s474 + $0xc] sm:$0xf]
    %v479 = vld [vmem:[%s474 + $0x10] sm:$0xf]
    %v480 = vld [vmem:[%s474 + $0x14] sm:$0xf]
    %v481 = vld [vmem:[%s474 + $0x18] sm:$0xf]
    %v482 = vld [vmem:[%s474 + $0x1c] sm:$0xf]
    %v483 = vld [vmem:[%s474 + $0x20] sm:$0xf]
    %v484 = vld [vmem:[%s474 + $0x24] sm:$0xf]
    %v485 = vld [vmem:[%s474 + $0x28] sm:$0xf]
    %v486 = vld [vmem:[%s474 + $0x2c] sm:$0xf]
    %v487 = vld [vmem:[%s474 + $0x30] sm:$0xf]
    %v488 = vld [vmem:[%s474 + $0x34] sm:$0xf]
    %v489 = vld [vmem:[%s474 + $0x38] sm:$0xf]
    %v490 = vld [vmem:[%s474 + $0x3c] sm:$0xf]
    %v491 = vpack.c.bf16 %v472, %v472
    %s492 = scalar_lea.vmem [#allocation2], 320
    %v493 = vld [vmem:[%s492] sm:$0xf]
    %v494 = vld [vmem:[%s492 + $0x4] sm:$0xf]
    %v495 = vld [vmem:[%s492 + $0x8] sm:$0xf]
    %v496 = vld [vmem:[%s492 + $0xc] sm:$0xf]
    %v497 = vld [vmem:[%s492 + $0x10] sm:$0xf]
    %v498 = vld [vmem:[%s492 + $0x14] sm:$0xf]
    %v499 = vld [vmem:[%s492 + $0x18] sm:$0xf]
    %v500 = vld [vmem:[%s492 + $0x1c] sm:$0xf]
    %v501 = vld [vmem:[%s492 + $0x20] sm:$0xf]
    %v502 = vld [vmem:[%s492 + $0x24] sm:$0xf]
    %v503 = vld [vmem:[%s492 + $0x28] sm:$0xf]
    %v504 = vld [vmem:[%s492 + $0x2c] sm:$0xf]
    %v505 = vld [vmem:[%s492 + $0x30] sm:$0xf]
    %v506 = vld [vmem:[%s492 + $0x34] sm:$0xf]
    %v507 = vld [vmem:[%s492 + $0x38] sm:$0xf]
    %v508 = vld [vmem:[%s492 + $0x3c] sm:$0xf]
    %v525 = vunpack.c.l.b16 %v493
    %v526 = vunpack.c.l.b16 %v494
    %v527 = vunpack.c.l.b16 %v495
    %v528 = vunpack.c.l.b16 %v496
    %v529 = vunpack.c.l.b16 %v497
    %v530 = vunpack.c.l.b16 %v498
    %v531 = vunpack.c.l.b16 %v499
    %v532 = vunpack.c.l.b16 %v500
    %v533 = vunpack.c.l.b16 %v501
    %v534 = vunpack.c.l.b16 %v502
    %v535 = vunpack.c.l.b16 %v503
    %v536 = vunpack.c.l.b16 %v504
    %v537 = vunpack.c.l.b16 %v505
    %v538 = vunpack.c.l.b16 %v506
    %v539 = vunpack.c.l.b16 %v507
    %v540 = vunpack.c.l.b16 %v508
    %v541 = vpack.c.b16 %v526, %v525
    %v542 = vpack.c.b16 %v528, %v527
    %v543 = vpack.c.b16 %v530, %v529
    %v544 = vpack.c.b16 %v532, %v531
    %v545 = vpack.c.b16 %v534, %v533
    %v546 = vpack.c.b16 %v536, %v535
    %v547 = vpack.c.b16 %v538, %v537
    %v548 = vpack.c.b16 %v540, %v539
    %557 = vmatprep.subr.bf16.mxu0 0
    %558 = vmatpush1.bf16.msra.mxu0 %v541
    %559 = vmatprep.subr.bf16.mxu0 0
    %560 = vmatpush1.bf16.msra.mxu0 %v542
    %561 = vmatprep.subr.bf16.mxu0 0
    %562 = vmatpush1.bf16.msra.mxu0 %v543
    %563 = vmatprep.subr.bf16.mxu0 0
    %564 = vmatpush1.bf16.msra.mxu0 %v544
    %565 = vmatprep.subr.bf16.mxu0 0
    %566 = vmatpush1.bf16.msra.mxu0 %v545
    %567 = vmatprep.subr.bf16.mxu0 0
    %568 = vmatpush1.bf16.msra.mxu0 %v546
    %569 = vmatprep.subr.bf16.mxu0 0
    %570 = vmatpush1.bf16.msra.mxu0 %v547
    %571 = vmatprep.subr.bf16.mxu0 0
    %572 = vmatpush1.bf16.msra.mxu0 %v548
    %573 = vmatprep.subr.bf16.mxu0 0
    %574 = vmatpush1.bf16.msra.mxu0 0
    %575 = vmatprep.subr.bf16.mxu0 0
    %576 = vmatpush1.bf16.msra.mxu0 0
    %577 = vmatprep.subr.bf16.mxu0 0
    %578 = vmatpush1.bf16.msra.mxu0 0
    %579 = vmatprep.subr.bf16.mxu0 0
    %580 = vmatpush1.bf16.msra.mxu0 0
    %581 = vmatprep.subr.bf16.mxu0 0
    %582 = vmatpush1.bf16.msra.mxu0 0
    %583 = vmatprep.subr.bf16.mxu0 0
    %584 = vmatpush1.bf16.msra.mxu0 0
    %585 = vmatprep.subr.bf16.mxu0 0
    %586 = vmatpush1.bf16.msra.mxu0 0
    %587 = vmatprep.subr.bf16.mxu0 0
    %588 = vmatpush1.bf16.msra.mxu0 0
    %589 = vmatprep.mubr.bf16.mxu0 0
    %590 = vmatmul.mubr.bf16.gmra.mrb[0].mxu0 %v491
    %v591 = vpop.f32.mrb[0].mxu0
    %v592 = vadd.f32 0.0, %v591
    %v593 = vpop.f32.mrb[0].mxu0
    %v594 = vpop.f32.mrb[0].mxu0
    %v595 = vpop.f32.mrb[0].mxu0
    %596 = vdwg.mxu0
    %v613 = vunpack.c.l.b16 %v475
    %v614 = vunpack.c.l.b16 %v476
    %v615 = vunpack.c.l.b16 %v477
    %v616 = vunpack.c.l.b16 %v478
    %v617 = vunpack.c.l.b16 %v479
    %v618 = vunpack.c.l.b16 %v480
    %v619 = vunpack.c.l.b16 %v481
    %v620 = vunpack.c.l.b16 %v482
    %v621 = vunpack.c.l.b16 %v483
    %v622 = vunpack.c.l.b16 %v484
    %v623 = vunpack.c.l.b16 %v485
    %v624 = vunpack.c.l.b16 %v486
    %v625 = vunpack.c.l.b16 %v487
    %v626 = vunpack.c.l.b16 %v488
    %v627 = vunpack.c.l.b16 %v489
    %v628 = vunpack.c.l.b16 %v490
    %v629 = vpack.c.b16 %v614, %v613
    %v630 = vpack.c.b16 %v616, %v615
    %v631 = vpack.c.b16 %v618, %v617
    %v632 = vpack.c.b16 %v620, %v619
    %v633 = vpack.c.b16 %v622, %v621
    %v634 = vpack.c.b16 %v624, %v623
    %v635 = vpack.c.b16 %v626, %v625
    %v636 = vpack.c.b16 %v628, %v627
    %645 = vmatprep.subr.bf16.mxu0 0
    %646 = vmatpush1.bf16.msra.mxu0 %v629
    %647 = vmatprep.subr.bf16.mxu0 0
    %648 = vmatpush1.bf16.msra.mxu0 %v630
    %649 = vmatprep.subr.bf16.mxu0 0
    %650 = vmatpush1.bf16.msra.mxu0 %v631
    %651 = vmatprep.subr.bf16.mxu0 0
    %652 = vmatpush1.bf16.msra.mxu0 %v632
    %653 = vmatprep.subr.bf16.mxu0 0
    %654 = vmatpush1.bf16.msra.mxu0 %v633
    %655 = vmatprep.subr.bf16.mxu0 0
    %656 = vmatpush1.bf16.msra.mxu0 %v634
    %657 = vmatprep.subr.bf16.mxu0 0
    %658 = vmatpush1.bf16.msra.mxu0 %v635
    %659 = vmatprep.subr.bf16.mxu0 0
    %660 = vmatpush1.bf16.msra.mxu0 %v636
    %661 = vmatprep.subr.bf16.mxu0 0
    %662 = vmatpush1.bf16.msra.mxu0 0
    %663 = vmatprep.subr.bf16.mxu0 0
    %664 = vmatpush1.bf16.msra.mxu0 0
    %665 = vmatprep.subr.bf16.mxu0 0
    %666 = vmatpush1.bf16.msra.mxu0 0
    %667 = vmatprep.subr.bf16.mxu0 0
    %668 = vmatpush1.bf16.msra.mxu0 0
    %669 = vmatprep.subr.bf16.mxu0 0
    %670 = vmatpush1.bf16.msra.mxu0 0
    %671 = vmatprep.subr.bf16.mxu0 0
    %672 = vmatpush1.bf16.msra.mxu0 0
    %673 = vmatprep.subr.bf16.mxu0 0
    %674 = vmatpush1.bf16.msra.mxu0 0
    %675 = vmatprep.subr.bf16.mxu0 0
    %676 = vmatpush1.bf16.msra.mxu0 0
    %677 = vmatprep.mubr.bf16.mxu0 0
    %678 = vmatmul.mubr.bf16.gmra.mrb[0].mxu0 %v473
    %v679 = vpop.f32.mrb[0].mxu0
    %v680 = vadd.f32 %v592, %v679
    %v681 = vpop.f32.mrb[0].mxu0
    %v682 = vpop.f32.mrb[0].mxu0
    %v683 = vpop.f32.mrb[0].mxu0
    %684 = vdwg.mxu0
    %v685 = vlaneseq
    %v686 = vshrl.u32 %v685, 7
    %v687 = vsub.s32 4, %v686
    %v688 = vrot.slane %v29, %v687
    %v689 = vadd.f32 %v680, %v688
    %v690 = vtanh.pop %v689
    %v691 = vlaneseq
    %v692 = vand.u32 %v691, 127
    %vm693 = vcmp.eq.s32.totalorder %v692, 12
    %v694 = vsel %vm693, %v689, %v690
    %695 = vst [vmem:[%s3] sm:$0xff] %v694
    // Predicated region
    $region18: #{_forward_jit.1} parent=1 // pred_check
      _
    $region19: #{_forward_jit.1} parent=1 // pred_check_branch
      %697 = sbr.rel (0) target = $region21
    $region20: #{_forward_jit.1} parent=1 // pred_region
      _
    $region21: #{_forward_jit.1} parent=1 // pred_fallthru
      _
    // Predicated region
    $region22: #{_forward_jit.1} parent=1 // pred_check
      _
    $region23: #{_forward_jit.1} parent=1 // pred_check_branch
      %699 = sbr.rel (0) target = $region25
    $region24: #{_forward_jit.1} parent=1 // pred_region
      _
    $region25: #{_forward_jit.1} parent=1 // pred_fallthru
      _
    %700 = vsyncpa [#allocation3], 1

</llo_original>
